<compile_context>
chip_gen: v7x
topology: tpu7x:2x2x1
jax: 0.10.0
libtpu: 0.0.40
codegen_flags: <defaults>
</compile_context>

<pallas_src>
import functools

import jax
import jax.numpy as jnp
from jax.experimental import pallas as pl
from jax.experimental.pallas import tpu as pltpu


def _neck2seq_kernel(x_ref, w_ref, b_ref, o_ref):
    # x_ref : (B, neck)   resident across all grid steps (constant index_map)
    # w_ref : (neck, bn)  one N-tile of the fused weight (bf16 or f32), streamed
    # b_ref : (1, bn)     matching bias tile (f32)
    # o_ref : (B, bn)     lane-dense output tile
    w = w_ref[...]
    x = x_ref[...].astype(w.dtype)                              # bf16 MXU path when w is bf16
    y = jnp.dot(x, w, preferred_element_type=jnp.float32)       # f32 accumulation on MXU
    y = y + b_ref[...].astype(jnp.float32)                      # bias add in f32 (v5e-safe)
    o_ref[...] = y.astype(o_ref.dtype)


def _pick_block_n(n_total, neck, itemsize, *, target_steps=2, vmem_budget=8 << 20):
    """Largest lane-aligned divisor of n_total under the (double-buffered) VMEM budget."""
    if n_total % 128 != 0:
        return n_total                      # block == full dim is always legal
    # VMEM cap: 2 buffers of (neck, bn) weights stay well under v7x's ~32 MiB scoped VMEM.
    max_bn = max(128, ((vmem_budget // (2 * neck * itemsize)) // 128) * 128)
    # Prefer >= target_steps grid steps so v7x's two TensorCores both get work.
    bn = min(n_total, max_bn, max(128, n_total // target_steps))
    bn = (bn // 128) * 128
    while n_total % bn != 0:                # shrink in lane multiples until it divides N
        bn -= 128
    return bn


@functools.partial(jax.jit, static_argnames=("seq_len", "d_model"))
def neck2seq(x, w_fused, bias_fused, *, seq_len, d_model):
    """Fused Neck2Seq forward.

    x          : (B, neck)
    w_fused    : (neck, S*d_model)  w_fused[:, s*d:(s+1)*d] == linear_s.weight.T
    bias_fused : (1, S*d_model)     bias_fused[0, s*d:(s+1)*d] == linear_s.bias
    returns    : (B, S, d_model)
    """
    B, neck = x.shape
    n_total = seq_len * d_model
    assert w_fused.shape == (neck, n_total)
    assert bias_fused.shape == (1, n_total)

    bn = _pick_block_n(n_total, neck, w_fused.dtype.itemsize)
    grid = (n_total // bn,)

    out_flat = pl.pallas_call(
        _neck2seq_kernel,
        out_shape=jax.ShapeDtypeStruct((B, n_total), jnp.float32),
        grid_spec=pltpu.PrefetchScalarGridSpec(
            num_scalar_prefetch=0,
            grid=grid,
            in_specs=[
                pl.BlockSpec((B, neck), lambda n: (0, 0)),     # x: resident in VMEM
                pl.BlockSpec((neck, bn), lambda n: (0, n)),    # streamed weight tiles
                pl.BlockSpec((1, bn), lambda n: (0, n)),       # matching bias tile
            ],
            out_specs=pl.BlockSpec((B, bn), lambda n: (0, n)),
        ),
        compiler_params=pltpu.CompilerParams(
            dimension_semantics=("parallel",),                 # shard N-tiles across v7x's 2 TCs
        ),
    )(x, w_fused, bias_fused)

    # Free contiguous reshape -- no transpose through HBM.
    return out_flat.reshape(B, seq_len, d_model)


def init_params(key, d_model, neck, max_seq_length, *, param_dtype=jnp.bfloat16):
    """PyTorch-style init (uniform +-1/sqrt(neck)), fused once at 'load' time."""
    kw, kb = jax.random.split(key)
    bound = 1.0 / jnp.sqrt(jnp.float32(neck))
    # PyTorch layout (S, d_model, neck); fuse once into (neck, S*d_model) -- not per forward.
    w_torch = jax.random.uniform(kw, (max_seq_length, d_model, neck),
                                 minval=-bound, maxval=bound, dtype=jnp.float32)
    b_torch = jax.random.uniform(kb, (max_seq_length, d_model),
                                 minval=-bound, maxval=bound, dtype=jnp.float32)
    w_fused = jnp.transpose(w_torch, (2, 0, 1)).reshape(neck, max_seq_length * d_model)
    bias_fused = b_torch.reshape(1, max_seq_length * d_model)
    # Weights streamed in bf16 (kernel is HBM-bound on this stream); bias kept f32.
    return w_fused.astype(param_dtype), bias_fused


if __name__ == "__main__":
    B = 2
    neck = 16
    d_model = 32
    max_seq_length = 8

    key = jax.random.PRNGKey(0)
    kx, kp = jax.random.split(key)
    x = jax.random.normal(kx, (B, neck), dtype=jnp.float32)
    w_fused, bias_fused = init_params(kp, d_model, neck, max_seq_length)

    out = neck2seq(x, w_fused, bias_fused, seq_len=max_seq_length, d_model=d_model)
    out = jax.block_until_ready(out)
    assert out.shape == (B, max_seq_length, d_model)

    # Reference in plain JAX with the exact operands the kernel sees (bf16-quantized W and x).
    x_q = x.astype(w_fused.dtype).astype(jnp.float32)
    w_q = w_fused.astype(jnp.float32)
    ref = (x_q @ w_q + bias_fused).reshape(B, max_seq_length, d_model)
    assert jnp.allclose(out, ref, atol=1e-4, rtol=1e-4), float(jnp.max(jnp.abs(out - ref)))

    print("KERNEL_OK")
</pallas_src>

<mosaic_0001>
module attributes {stable_mosaic.version = 11 : i64} {
  func.func @_neck2seq_kernel(%arg0: i32, %arg1: memref<2x16xf32, #tpu.memory_space<vmem>>, %arg2: memref<16x128xbf16, #tpu.memory_space<vmem>>, %arg3: memref<1x128xf32, #tpu.memory_space<vmem>>, %arg4: memref<2x128xf32, #tpu.memory_space<vmem>>) attributes {dimension_semantics = [#tpu.dimension_semantics<parallel>], iteration_bounds = array<i64: 2>, scalar_prefetch = 0 : i64, scratch_operands = 0 : i64, tpu.core_type = #tpu.core_type<tc>, window_params = [{pipeline_mode = #tpu.pipeline_mode<synchronous>, transform_indices = @transform_0, window_bounds = array<i64: 2, 16>}, {transform_indices = @transform_1, window_bounds = array<i64: 16, 128>}, {transform_indices = @transform_2, window_bounds = array<i64: 1, 128>}, {transform_indices = @transform_3, window_bounds = array<i64: 2, 128>}]} {
    %c0 = arith.constant 0 : index
    %c0_0 = arith.constant 0 : index
    %0 = vector.load %arg2[%c0, %c0_0] : memref<16x128xbf16, #tpu.memory_space<vmem>>, vector<16x128xbf16>
    %c0_1 = arith.constant 0 : index
    %c0_2 = arith.constant 0 : index
    %1 = vector.load %arg1[%c0_1, %c0_2] : memref<2x16xf32, #tpu.memory_space<vmem>>, vector<2x16xf32>
    %2 = arith.truncf %1 : vector<2x16xf32> to vector<2x16xbf16>
    %cst = arith.constant dense<0.000000e+00> : vector<2x128xf32>
    %3 = tpu.matmul %2, %0, %cst {dimension_numbers = #tpu.dot_dimension_numbers<[1], [0], [0], [1], [0, 0, 1, 1], [], []>} : vector<2x16xbf16>, vector<16x128xbf16>, vector<2x128xf32> -> vector<2x128xf32>
    %c0_3 = arith.constant 0 : index
    %c0_4 = arith.constant 0 : index
    %4 = vector.load %arg3[%c0_3, %c0_4] : memref<1x128xf32, #tpu.memory_space<vmem>>, vector<1x128xf32>
    %5 = vector.broadcast %4 : vector<1x128xf32> to vector<2x128xf32>
    %6 = arith.addf %3, %5 : vector<2x128xf32>
    %c0_5 = arith.constant 0 : index
    %c0_6 = arith.constant 0 : index
    %7 = vector.load %arg4[%c0_5, %c0_6] : memref<2x128xf32, #tpu.memory_space<vmem>>, vector<2x128xf32>
    tpu.vector_store %arg4[%c0_5, %c0_6], %6 {strides = array<i32>} : memref<2x128xf32, #tpu.memory_space<vmem>>, vector<2x128xf32>,
    return
  }
  func.func @transform_0(%arg0: i32) -> (i32, i32) {
    %c0_i32 = arith.constant 0 : i32
    %c0_i32_0 = arith.constant 0 : i32
    %c0_i32_1 = arith.constant 0 : i32
    return %c0_i32, %c0_i32_0 : i32, i32
  }
  func.func @transform_1(%arg0: i32) -> (i32, i32) {
    %c0_i32 = arith.constant 0 : i32
    %c0_i32_0 = arith.constant 0 : i32
    return %c0_i32, %arg0 : i32, i32
  }
  func.func @transform_2(%arg0: i32) -> (i32, i32) {
    %c0_i32 = arith.constant 0 : i32
    %c0_i32_0 = arith.constant 0 : i32
    return %c0_i32, %arg0 : i32, i32
  }
  func.func @transform_3(%arg0: i32) -> (i32, i32) {
    %c0_i32 = arith.constant 0 : i32
    %c0_i32_0 = arith.constant 0 : i32
    return %c0_i32, %arg0 : i32, i32
  }
}

</mosaic_0001>

<llo_original>
// kernel: neck2seq.1
$region0: #{neck2seq.1}
  #allocation0 [shape = 'u32[]', space=smem, size = 0x4, offset = 0x4, fixed_abs, tag = 'smem constant byte address 0x4 - core index']
  #allocation1 [shape = 'u32[144,128]{1,0:T(1,128)}', space=vmem, size = 0x12000, scoped, tag = 'internal scratch']
  %s0 = inlined_call_operand.hbm [shape: f32[2,16], index: 0, kind: input, shape index: {}]
  %s1 = inlined_call_operand.hbm [shape: bf16[16,256], index: 1, kind: input, shape index: {}]
  %s2 = inlined_call_operand.vmem [shape: f32[1,256], index: 2, kind: input, shape index: {}]
  %s3 = inlined_call_operand.vmem [shape: f32[2,256], index: 3, kind: output, shape index: {}]
  %s4 = sld [smem:[#allocation0]]
  $region53: #{neck2seq.1} parent=0
    _
  %s6 = ssub.s32 1, %s4
  %s7 = scalar_select 0, %s6, %s4
  $region1: #{neck2seq.1} parent=0
    #allocation2 [shape = 'u8[1024]{0}', space=vmem, size = 0x400, scoped, tag = 'input window, operand 0, single buffered']
    #allocation3 [shape = 's32[2]{0}', space=sflag, size = 0x8, scoped, tag = 'scoped memory for neck2seq.1']
    #allocation4 [shape = 'u8[8192]{0}', space=vmem, size = 0x2000, scoped, tag = 'input window, operand 1']
    #allocation5 [shape = 's32[2]{0}', space=sflag, size = 0x8, scoped, tag = 'scoped memory for neck2seq.1']
    %8 = vsyncpa [#allocation3], 0
    %9 = vsyncpa [#allocation5], 0
    %s10 = scalar_lea.sflag [#allocation5], 1
    %11 = vsyncpa %s10, 0
    loop: start=0, step=1, limit=4
    $region2: #{neck2seq.1} parent=1 // loop_pre_header
      _
    $region3: #{neck2seq.1} parent=1 // loop_header
      %s13 = sphi 0, %s17
      %p14 = scmp.ge.s32.totalorder %s13, 4
      %s21 = sphi 0, %s21
      %s23 = sphi 0, %s21
      %s24 = sphi 0, %s23
      %s38 = sphi 0, %s24
      %s44 = sphi 0, %s46
      %s47 = sphi 0, %s44
      %s48 = sphi 0, %s47
      %s64 = sphi 0, %s48
      %s70 = sphi 0, %s72
      %s73 = sphi 0, %s70
      %s74 = sphi 0, %s73
      %s90 = sphi 0, %s74
      %s96 = sphi 0, %s98
      %s99 = sphi 0, %s96
      %s100 = sphi 0, %s99
      %s116 = sphi 0, %s100
    $region4: #{neck2seq.1} parent=1 // loop_header_branch
      %16 = sbr.rel (%p14) target = $region8
    $region5: #{neck2seq.1} parent=1 // loop_body
      %s18 = ssub.s32 %s13, 1
      %s19 = ssub.s32 %s13, 2
      %s20 = sadd.s32 %s13, 1
      %s22 = sadd.s32 %s21, 1
      %p25 = scmp.eq.s32.totalorder %s13, 1
      %p26 = scmp.ne.s32.totalorder %s21, %s23
      %p27 = scmp.eq.s32.totalorder %s13, 0
      %p28 = por %p26, %p27
      %p29 = scmp.ne.s32.totalorder %s21, %s23
      %p30 = scmp.eq.s32.totalorder %s18, 1
      %p31 = por %p29, %p30
      %p32 = scmp.ne.s32.totalorder %s23, %s24
      %p33 = scmp.eq.s32.totalorder %s18, 0
      %p34 = por %p32, %p33
      %p35 = scmp.ne.s32.totalorder %s23, %s24
      %p36 = scmp.eq.s32.totalorder %s19, 1
      %p37 = por %p35, %p36
      %p39 = scmp.ne.s32.totalorder %s24, %s38
      %p40 = scmp.eq.s32.totalorder %s19, 0
      %p41 = por %p39, %p40
      %s42 = ssub.s32 %s13, %s20
      %p43 = scmp.eq.s32.totalorder %s42, 0
      %s45 = sadd.s32 %s44, 1
      %s46 = scalar_select %p43, %s44, %s45
      %p49 = pneg %p43
      %p50 = scmp.eq.s32.totalorder %s13, 1
      %p51 = por %p49, %p50
      %p52 = scmp.ne.s32.totalorder %s44, %s47
      %p53 = scmp.eq.s32.totalorder %s13, 0
      %p54 = por %p52, %p53
      %p55 = scmp.ne.s32.totalorder %s44, %s47
      %p56 = scmp.eq.s32.totalorder %s18, 1
      %p57 = por %p55, %p56
      %p58 = scmp.ne.s32.totalorder %s47, %s48
      %p59 = scmp.eq.s32.totalorder %s18, 0
      %p60 = por %p58, %p59
      %p61 = scmp.ne.s32.totalorder %s47, %s48
      %p62 = scmp.eq.s32.totalorder %s19, 1
      %p63 = por %p61, %p62
      %p65 = scmp.ne.s32.totalorder %s48, %s64
      %p66 = scmp.eq.s32.totalorder %s19, 0
      %p67 = por %p65, %p66
      %s68 = ssub.s32 %s13, %s20
      %p69 = scmp.eq.s32.totalorder %s68, 0
      %s71 = sadd.s32 %s70, 1
      %s72 = scalar_select %p69, %s70, %s71
      %p75 = pneg %p69
      %p76 = scmp.eq.s32.totalorder %s13, 1
      %p77 = por %p75, %p76
      %p78 = scmp.ne.s32.totalorder %s70, %s73
      %p79 = scmp.eq.s32.totalorder %s13, 0
      %p80 = por %p78, %p79
      %p81 = scmp.ne.s32.totalorder %s70, %s73
      %p82 = scmp.eq.s32.totalorder %s18, 1
      %p83 = por %p81, %p82
      %p84 = scmp.ne.s32.totalorder %s73, %s74
      %p85 = scmp.eq.s32.totalorder %s18, 0
      %p86 = por %p84, %p85
      %p87 = scmp.ne.s32.totalorder %s73, %s74
      %p88 = scmp.eq.s32.totalorder %s19, 1
      %p89 = por %p87, %p88
      %p91 = scmp.ne.s32.totalorder %s74, %s90
      %p92 = scmp.eq.s32.totalorder %s19, 0
      %p93 = por %p91, %p92
      %s94 = ssub.s32 %s13, %s20
      %p95 = scmp.eq.s32.totalorder %s94, 0
      %s97 = sadd.s32 %s96, 1
      %s98 = scalar_select %p95, %s96, %s97
      %p101 = pneg %p95
      %p102 = scmp.eq.s32.totalorder %s13, 1
      %p103 = por %p101, %p102
      %p104 = scmp.ne.s32.totalorder %s96, %s99
      %p105 = scmp.eq.s32.totalorder %s13, 0
      %p106 = por %p104, %p105
      %p107 = scmp.ne.s32.totalorder %s96, %s99
      %p108 = scmp.eq.s32.totalorder %s18, 1
      %p109 = por %p107, %p108
      %p110 = scmp.ne.s32.totalorder %s99, %s100
      %p111 = scmp.eq.s32.totalorder %s18, 0
      %p112 = por %p110, %p111
      %p113 = scmp.ne.s32.totalorder %s99, %s100
      %p114 = scmp.eq.s32.totalorder %s19, 1
      %p115 = por %p113, %p114
      %p117 = scmp.ne.s32.totalorder %s100, %s116
      %p118 = scmp.eq.s32.totalorder %s19, 0
      %p119 = por %p117, %p118
      %p120 = scmp.le.s32.totalorder 1, %s13
      %p121 = scmp.lt.s32.totalorder %s13, 3
      %p122 = pnand %p120, %p121
      %p123 = pneg %p122
      // Predicated region
      $region9: #{neck2seq.1} parent=5 // pred_check
        _
      $region10: #{neck2seq.1} parent=5 // pred_check_branch
        %125 = sbr.rel (%p122) target = $region12
      $region11: #{neck2seq.1} parent=5 // pred_region
        %s126 = ssub.s32 %s13, 1
        // Predicated region
        $region13: #{neck2seq.1} parent=11 // pred_check
          %p127 = pneg %p34
        $region14: #{neck2seq.1} parent=11 // pred_check_branch
          %129 = sbr.rel (%p127) target = $region16
        $region15: #{neck2seq.1} parent=11 // pred_region
          %s131 = ssub.s32 32, 32
          %132 = vsyncadd [#allocation3], %s131
          %s134 = sshll.u32 [#allocation2], 4
          %s135 = int_to_ptr.vmem [resolvable:$true] %s134
          %137 = dma.hbm_to_vmem [thread:$0]  %s0, 32, %s135, [#allocation3]
        $region16: #{neck2seq.1} parent=11 // pred_fallthru
          _
      $region12: #{neck2seq.1} parent=5 // pred_fallthru
        _
      %p138 = scmp.lt.s32.totalorder %s13, 2
      // Predicated region
      $region17: #{neck2seq.1} parent=5 // pred_check
        %p139 = pneg %p138
      $region18: #{neck2seq.1} parent=5 // pred_check_branch
        %141 = sbr.rel (%p139) target = $region20
      $region19: #{neck2seq.1} parent=5 // pred_region
        // Predicated region
        $region21: #{neck2seq.1} parent=19 // pred_check
          %p142 = pneg %p54
        $region22: #{neck2seq.1} parent=19 // pred_check_branch
          %144 = sbr.rel (%p142) target = $region24
        $region23: #{neck2seq.1} parent=19 // pred_region
          %s145 = sand.u32 %s44, 1
          %s146 = scalar_lea.sflag [#allocation5], %s145
          %s147 = sand.u32 %s44, 1
          %s148 = smul.addr %s147, 8
          %s149 = scalar_lea.vmem [#allocation4], %s148
          %s151 = ssub.s32 128, 128
          %152 = vsyncadd %s146, %s151
          %s153 = smul.addr %s13, 64
          %s154 = scalar_lea.hbm %s1, %s153
          %s155 = sshll.u32 %s149, 4
          %s156 = int_to_ptr.vmem [resolvable:$true] %s155
          %161 = dma.hbm_to_vmem [thread:$0]  %s154, 128, %s156, %s146, 128, 64, 4
        $region24: #{neck2seq.1} parent=19 // pred_fallthru
          _
        // Predicated region
        $region25: #{neck2seq.1} parent=19 // pred_check
          %p162 = pneg %p80
        $region26: #{neck2seq.1} parent=19 // pred_check_branch
          %164 = sbr.rel (%p162) target = $region28
        $region27: #{neck2seq.1} parent=19 // pred_region
          %p165 = scmp.lt.s32.totalorder %s13, 1
          %s166 = scalar_select %p165, %s13, 1
          %s167 = scalar_lea.vmem %s2, %s166
        $region28: #{neck2seq.1} parent=19 // pred_fallthru
          _
      $region20: #{neck2seq.1} parent=5 // pred_fallthru
        _
      %p168 = scmp.le.s32.totalorder 1, %s13
      %p169 = scmp.lt.s32.totalorder %s13, 3
      %p170 = pnand %p168, %p169
      %p171 = pneg %p170
      // Predicated region
      $region29: #{neck2seq.1} parent=5 // pred_check
        _
      $region30: #{neck2seq.1} parent=5 // pred_check_branch
        %173 = sbr.rel (%p170) target = $region32
      $region31: #{neck2seq.1} parent=5 // pred_region
        %s174 = ssub.s32 %s13, 1
        // Predicated region
        $region33: #{neck2seq.1} parent=31 // pred_check
          %p175 = pneg %p34
        $region34: #{neck2seq.1} parent=31 // pred_check_branch
          %177 = sbr.rel (%p175) target = $region36
        $region35: #{neck2seq.1} parent=31 // pred_region
          %178 = dma.done [#allocation3], 32
        $region36: #{neck2seq.1} parent=31 // pred_fallthru
          _
        %s179 = sand.u32 %s47, 1
        %s180 = scalar_lea.sflag [#allocation5], %s179
        %s181 = sand.u32 %s47, 1
        %s182 = smul.addr %s181, 8
        %s183 = scalar_lea.vmem [#allocation4], %s182
        // Predicated region
        $region37: #{neck2seq.1} parent=31 // pred_check
          %p184 = pneg %p60
        $region38: #{neck2seq.1} parent=31 // pred_check_branch
          %186 = sbr.rel (%p184) target = $region40
        $region39: #{neck2seq.1} parent=31 // pred_region
          %187 = dma.done %s180, 128
        $region40: #{neck2seq.1} parent=31 // pred_fallthru
          _
        %p188 = pneg %p34
        %p189 = pneg %p31
        %s190 = sand.u32 %s47, 1
        %s191 = scalar_lea.sflag [#allocation5], %s190
        %s192 = sand.u32 %s47, 1
        %s193 = smul.addr %s192, 8
        %s194 = scalar_lea.vmem [#allocation4], %s193
        %p195 = pneg %p60
        %p196 = pneg %p57
        %p197 = scmp.lt.s32.totalorder %s18, 1
        %s198 = scalar_select %p197, %s18, 1
        %s199 = scalar_lea.vmem %s2, %s198
        %p200 = pneg %p86
        %p201 = pneg %p83
        %p202 = pneg %p112
        %p203 = pneg %p109
        %p204 = scmp.lt.s32.totalorder %s18, 1
        %s205 = scalar_select %p204, %s18, 1
        %s206 = smul.addr %s205, 2
        %s207 = scalar_lea.vmem %s3, %s206
        %p208 = scmp.lt.s32.totalorder %s18, 1
        %s209 = scalar_select %p208, %s18, 1
        %s210 = scalar_lea.vmem %s2, %s209
        %p211 = scmp.lt.s32.totalorder %s18, 1
        %s212 = scalar_select %p211, %s18, 1
        %s213 = smul.addr %s212, 2
        %s214 = scalar_lea.vmem %s3, %s213
        %v216 = vld [vmem:[%s183] sm:$0xf]
        %v217 = vld [vmem:[%s183 + $0x4] sm:$0xf]
        %v218 = vld [vmem:[#allocation2] sm:$0x3]
        %v219 = vpack.c.bf16 %v218, %v218
        %v220 = vld [vmem:[%s210] sm:$0x1]
        %v222 = vlaneseq
        %v223 = vshrl.u32 %v222, 7
        %v224 = vsub.s32 0, %v223
        %v225 = vrot.slane %v220, %v224
        %v229 = vunpack.c.l.b16 %v216
        %v230 = vunpack.c.l.b16 %v217
        %v231 = vpack.c.b16 %v230, %v229
        %vm233 = vcmask 130048
        %v235 = vsel %vm233, %v219, 0
        %237 = vmatprep.subr.bf16.mxu0 0
        %238 = vmatpush1.bf16.msra.mxu0 %v231
        %239 = vmatprep.subr.bf16.mxu0 0
        %240 = vmatpush1.bf16.msra.mxu0 0
        %241 = vmatprep.subr.bf16.mxu0 0
        %242 = vmatpush1.bf16.msra.mxu0 0
        %243 = vmatprep.subr.bf16.mxu0 0
        %244 = vmatpush1.bf16.msra.mxu0 0
        %245 = vmatprep.subr.bf16.mxu0 0
        %246 = vmatpush1.bf16.msra.mxu0 0
        %247 = vmatprep.subr.bf16.mxu0 0
        %248 = vmatpush1.bf16.msra.mxu0 0
        %249 = vmatprep.subr.bf16.mxu0 0
        %250 = vmatpush1.bf16.msra.mxu0 0
        %251 = vmatprep.subr.bf16.mxu0 0
        %252 = vmatpush1.bf16.msra.mxu0 0
        %253 = vmatprep.subr.bf16.mxu0 0
        %254 = vmatpush1.bf16.msra.mxu0 0
        %255 = vmatprep.subr.bf16.mxu0 0
        %256 = vmatpush1.bf16.msra.mxu0 0
        %257 = vmatprep.subr.bf16.mxu0 0
        %258 = vmatpush1.bf16.msra.mxu0 0
        %259 = vmatprep.subr.bf16.mxu0 0
        %260 = vmatpush1.bf16.msra.mxu0 0
        %261 = vmatprep.subr.bf16.mxu0 0
        %262 = vmatpush1.bf16.msra.mxu0 0
        %263 = vmatprep.subr.bf16.mxu0 0
        %264 = vmatpush1.bf16.msra.mxu0 0
        %265 = vmatprep.subr.bf16.mxu0 0
        %266 = vmatpush1.bf16.msra.mxu0 0
        %267 = vmatprep.subr.bf16.mxu0 0
        %268 = vmatpush1.bf16.msra.mxu0 0
        %269 = vmatprep.mubr.bf16.mxu0 0
        %270 = vmatmul.mubr.bf16.gmra.mrb[0].mxu0 %v235
        %v271 = vpop.f32.mrb[0].mxu0
        %v272 = vadd.f32 %v225, %v271
        %v273 = vpop.f32.mrb[0].mxu0
        %v274 = vpop.f32.mrb[0].mxu0
        %v275 = vpop.f32.mrb[0].mxu0
        %276 = vdwg.mxu0
        %277 = vst [vmem:[%s214] sm:$0x3] %v272
        %p278 = scmp.lt.s32.totalorder %s18, 1
        %s279 = scalar_select %p278, %s18, 1
        %s280 = smul.addr %s279, 2
        %s281 = scalar_lea.vmem %s3, %s280
        // Predicated region
        $region41: #{neck2seq.1} parent=31 // pred_check
          %p282 = pneg %p109
        $region42: #{neck2seq.1} parent=31 // pred_check_branch
          %284 = sbr.rel (%p282) target = $region44
        $region43: #{neck2seq.1} parent=31 // pred_region
          _
        $region44: #{neck2seq.1} parent=31 // pred_fallthru
          _
      $region32: #{neck2seq.1} parent=5 // pred_fallthru
        _
      %p285 = scmp.le.s32.totalorder 2, %s13
      // Predicated region
      $region45: #{neck2seq.1} parent=5 // pred_check
        %p286 = pneg %p285
      $region46: #{neck2seq.1} parent=5 // pred_check_branch
        %288 = sbr.rel (%p286) target = $region48
      $region47: #{neck2seq.1} parent=5 // pred_region
        %s289 = ssub.s32 %s13, 2
        // Predicated region
        $region49: #{neck2seq.1} parent=47 // pred_check
          %p290 = pneg %p115
        $region50: #{neck2seq.1} parent=47 // pred_check_branch
          %292 = sbr.rel (%p290) target = $region52
        $region51: #{neck2seq.1} parent=47 // pred_region
          %p293 = scmp.lt.s32.totalorder %s19, 1
          %s294 = scalar_select %p293, %s19, 1
          %s295 = smul.addr %s294, 2
          %s296 = scalar_lea.vmem %s3, %s295
        $region52: #{neck2seq.1} parent=47 // pred_fallthru
          _
      $region48: #{neck2seq.1} parent=5 // pred_fallthru
        _
    $region6: #{neck2seq.1} parent=1 // loop_footer
      %s17 = sadd.s32 1, %s13
    $region7: #{neck2seq.1} parent=1 // loop_footer_branch
      %12 = sbr.rel target = $region3
    $region8: #{neck2seq.1} parent=1 // loop_exit
      _
    %297 = vsyncpa [#allocation3], 1
    %s298 = scalar_lea.sflag [#allocation3], 1
    %299 = vsyncpa %s298, 1
    %300 = vsyncpa [#allocation5], 1
    %s301 = scalar_lea.sflag [#allocation5], 1
    %302 = vsyncpa %s301, 1

</llo_original>
